<compile_context>
chip_gen: v7x
topology: tpu7x:2x2x1
jax: 0.10.0
libtpu: 0.0.40
codegen_flags: <defaults>
</compile_context>

<pallas_src>
import functools
import math

import jax
import jax.numpy as jnp
from jax.experimental import pallas as pl
from jax.experimental.pallas import tpu as pltpu

_ISSUE_GROUP = 8  # static unroll factor inside the DMA-issue loop


def _embeddings_kernel(ids_ref, lut_hbm, out_ref, sem, *, scale, tok_block):
    """One grid step: gather `tok_block` embedding rows into out_ref, scale.

    ids_ref : SMEM int32[(n_ids,)]            scalar-prefetched token ids
    lut_hbm : HBM ref (vocab, d_model_pad)    memory_space=pl.ANY, manual DMA
    out_ref : VMEM (tok_block, d_model_pad)   output tile (DMA destination)
    sem     : single shared DMA semaphore
    """
    base = pl.program_id(0) * tok_block

    # Issue all row-gather DMAs for this block; they land directly in out_ref.
    # Outer dynamic loop keeps code size bounded; inner static unroll keeps
    # the scalar/issue path dense for the scheduler.
    @pl.loop(0, tok_block // _ISSUE_GROUP)
    def _(g):
        for u in range(_ISSUE_GROUP):           # static unroll
            t = g * _ISSUE_GROUP + u
            tok = ids_ref[base + t]             # scalar read from SMEM
            pltpu.make_async_copy(
                lut_hbm.at[pl.ds(tok, 1), :],   # one (1, D) table row in HBM
                out_ref.at[pl.ds(t, 1), :],     # straight into the output tile
                sem,                            # shared semaphore (byte-counted)
            ).start()

    # One aggregate wait for all tok_block row copies: the wait descriptor
    # covers the whole (tok_block, D) block, i.e. the summed bytes of all rows.
    pltpu.make_async_copy(out_ref, out_ref, sem).wait()

    # Scale by sqrt(d_model) in f32, cast once at the store (lane-dense vst).
    out_ref[...] = (out_ref[...].astype(jnp.float32) * scale).astype(out_ref.dtype)


def embeddings(ids, lut, *, tok_block=None):
    """Pallas equivalent of Embeddings.forward: lut[ids] * sqrt(d_model).

    ids : int array (B, S) of token indices into `lut`.
    lut : (vocab, d_model) embedding table.
    returns (B, S, d_model) in lut.dtype.
    """
    B, S = ids.shape
    vocab, D = lut.shape
    dtype = lut.dtype
    itemsize = jnp.dtype(dtype).itemsize
    scale = math.sqrt(float(D))

    # Lane-dense output: pad the embedding dim to a multiple of 128 (free when
    # d_model is already 128-aligned; one-time table pad otherwise).
    D_pad = ((D + 127) // 128) * 128
    lut_p = lut if D_pad == D else jnp.pad(lut, ((0, 0), (0, D_pad - D)))

    # dtype-aware sublane tile: 8 (f32), 16 (bf16), 32 (int8/fp8)
    min_sub = max(8, 32 // itemsize)
    n_tok = B * S

    if tok_block is None:
        # Largest block (cap 512) whose double-buffered output fits a ~12 MiB
        # VMEM budget -- safe under the scoped-VMEM default on all chips.
        vmem_budget = 12 * 1024 * 1024
        tb = vmem_budget // (2 * D_pad * itemsize)
        tb = min(512, max(min_sub, (tb // min_sub) * min_sub))
        # Don't make the block larger than the (padded) token count.
        tok_block = min(tb, ((n_tok + min_sub - 1) // min_sub) * min_sub)
    else:
        tok_block = max(min_sub,
                        ((tok_block + min_sub - 1) // min_sub) * min_sub)

    n_blocks_total = pl.cdiv(n_tok, tok_block)
    n_pad = n_blocks_total * tok_block

    ids_flat = jnp.reshape(ids, (n_tok,)).astype(jnp.int32)
    if n_pad != n_tok:
        # Padded tokens look up row 0 (always valid) and are dropped below.
        ids_flat = jnp.pad(ids_flat, (0, n_pad - n_tok))

    kernel = functools.partial(_embeddings_kernel, scale=scale,
                               tok_block=tok_block)

    def run_chunk(ids_chunk):
        n_blocks = ids_chunk.shape[0] // tok_block
        return pl.pallas_call(
            kernel,
            out_shape=jax.ShapeDtypeStruct((ids_chunk.shape[0], D_pad), dtype),
            grid_spec=pltpu.PrefetchScalarGridSpec(
                num_scalar_prefetch=1,                         # ids -> SMEM
                grid=(n_blocks,),
                in_specs=[pl.BlockSpec(memory_space=pl.ANY)],  # table in HBM
                out_specs=pl.BlockSpec((tok_block, D_pad),
                                       lambda i, ids_sm: (i, 0)),
                scratch_shapes=[pltpu.SemaphoreType.DMA(())],  # one shared sem
            ),
            compiler_params=pltpu.CompilerParams(
                dimension_semantics=("parallel",),
            ),
        )(ids_chunk, lut_p)

    # Chunk the scalar prefetch so the SMEM id array stays <= ~64 KiB.
    ids_per_call = max(tok_block, (16384 // tok_block) * tok_block)
    if n_pad <= ids_per_call:
        out_flat = run_chunk(ids_flat)
    else:
        out_flat = jnp.concatenate(
            [run_chunk(ids_flat[s:s + ids_per_call])
             for s in range(0, n_pad, ids_per_call)],
            axis=0)

    if n_pad != n_tok or D_pad != D:
        out_flat = out_flat[:n_tok, :D]
    return out_flat.reshape(B, S, D)


if __name__ == "__main__":
    # Small shapes consistent with the module: batch=2, seq=8, d_model=32, vocab=64.
    B, S, D, V = 2, 8, 32, 64
    key = jax.random.PRNGKey(0)
    k_ids, k_lut = jax.random.split(key)
    ids = jax.random.randint(k_ids, (B, S), 0, V, dtype=jnp.int32)
    lut = jax.random.normal(k_lut, (V, D), dtype=jnp.float32)

    out = embeddings(ids, lut)
    out = jax.block_until_ready(out)

    ref = lut[ids] * math.sqrt(D)
    assert out.shape == (B, S, D)
    err = jnp.max(jnp.abs(out - ref))
    assert err < 1e-5, float(err)

    print("KERNEL_OK")
</pallas_src>

<mosaic_0001>
module attributes {stable_mosaic.version = 11 : i64} {
  func.func @_embeddings_kernel(%arg0: i32, %arg1: memref<16xi32, #tpu.memory_space<smem>>, %arg2: memref<64x128xf32, #tpu.memory_space<any>>, %arg3: memref<16x128xf32, #tpu.memory_space<vmem>>, %arg4: memref<!tpu.dma_semaphore, #tpu.memory_space<semaphore_mem>>) attributes {dimension_semantics = [#tpu.dimension_semantics<parallel>], iteration_bounds = array<i64: 1>, scalar_prefetch = 1 : i64, scratch_operands = 1 : i64, tpu.core_type = #tpu.core_type<tc>, window_params = [{}, {transform_indices = @transform_1, window_bounds = array<i64: 16, 128>}]} {
    %c16_i32 = arith.constant 16 : i32
    %0 = arith.muli %arg0, %c16_i32 : i32
    %c0_i32 = arith.constant 0 : i32
    %c2_i32 = arith.constant 2 : i32
    %1 = arith.addi %c0_i32, %c2_i32 : i32
    %c1_i32 = arith.constant 1 : i32
    scf.for %arg5 = %c0_i32 to %1 step %c1_i32  : i32 {
      %c1_i32_4 = arith.constant 1 : i32
      %6 = arith.muli %arg5, %c1_i32_4 : i32
      %c0_i32_5 = arith.constant 0 : i32
      %7 = arith.addi %c0_i32_5, %6 : i32
      %c8_i32 = arith.constant 8 : i32
      %8 = arith.muli %7, %c8_i32 : i32
      %c0_i32_6 = arith.constant 0 : i32
      %9 = arith.addi %8, %c0_i32_6 : i32
      %10 = arith.addi %0, %9 : i32
      %11 = arith.index_cast %10 : i32 to index
      %12 = memref.load %arg1[%11] : memref<16xi32, #tpu.memory_space<smem>>
      %c0_i32_7 = arith.constant 0 : i32
      %13 = tpu.memref_slice %arg2[%12, %c0_i32_7] : memref<64x128xf32, #tpu.memory_space<any>> -> memref<1x128xf32, #tpu.memory_space<any>>
      %c0_i32_8 = arith.constant 0 : i32
      %14 = tpu.memref_slice %arg3[%9, %c0_i32_8] : memref<16x128xf32, #tpu.memory_space<vmem>> -> memref<1x128xf32, #tpu.memory_space<vmem>>
      tpu.enqueue_dma source(%13 : memref<1x128xf32, #tpu.memory_space<any>>) target(%14 : memref<1x128xf32, #tpu.memory_space<vmem>>) target_semaphore(%arg4 : memref<!tpu.dma_semaphore, #tpu.memory_space<semaphore_mem>>)
      %c8_i32_9 = arith.constant 8 : i32
      %15 = arith.muli %7, %c8_i32_9 : i32
      %c1_i32_10 = arith.constant 1 : i32
      %16 = arith.addi %15, %c1_i32_10 : i32
      %17 = arith.addi %0, %16 : i32
      %18 = arith.index_cast %17 : i32 to index
      %19 = memref.load %arg1[%18] : memref<16xi32, #tpu.memory_space<smem>>
      %c0_i32_11 = arith.constant 0 : i32
      %20 = tpu.memref_slice %arg2[%19, %c0_i32_11] : memref<64x128xf32, #tpu.memory_space<any>> -> memref<1x128xf32, #tpu.memory_space<any>>
      %c0_i32_12 = arith.constant 0 : i32
      %21 = tpu.memref_slice %arg3[%16, %c0_i32_12] : memref<16x128xf32, #tpu.memory_space<vmem>> -> memref<1x128xf32, #tpu.memory_space<vmem>>
      tpu.enqueue_dma source(%20 : memref<1x128xf32, #tpu.memory_space<any>>) target(%21 : memref<1x128xf32, #tpu.memory_space<vmem>>) target_semaphore(%arg4 : memref<!tpu.dma_semaphore, #tpu.memory_space<semaphore_mem>>)
      %c8_i32_13 = arith.constant 8 : i32
      %22 = arith.muli %7, %c8_i32_13 : i32
      %c2_i32_14 = arith.constant 2 : i32
      %23 = arith.addi %22, %c2_i32_14 : i32
      %24 = arith.addi %0, %23 : i32
      %25 = arith.index_cast %24 : i32 to index
      %26 = memref.load %arg1[%25] : memref<16xi32, #tpu.memory_space<smem>>
      %c0_i32_15 = arith.constant 0 : i32
      %27 = tpu.memref_slice %arg2[%26, %c0_i32_15] : memref<64x128xf32, #tpu.memory_space<any>> -> memref<1x128xf32, #tpu.memory_space<any>>
      %c0_i32_16 = arith.constant 0 : i32
      %28 = tpu.memref_slice %arg3[%23, %c0_i32_16] : memref<16x128xf32, #tpu.memory_space<vmem>> -> memref<1x128xf32, #tpu.memory_space<vmem>>
      tpu.enqueue_dma source(%27 : memref<1x128xf32, #tpu.memory_space<any>>) target(%28 : memref<1x128xf32, #tpu.memory_space<vmem>>) target_semaphore(%arg4 : memref<!tpu.dma_semaphore, #tpu.memory_space<semaphore_mem>>)
      %c8_i32_17 = arith.constant 8 : i32
      %29 = arith.muli %7, %c8_i32_17 : i32
      %c3_i32 = arith.constant 3 : i32
      %30 = arith.addi %29, %c3_i32 : i32
      %31 = arith.addi %0, %30 : i32
      %32 = arith.index_cast %31 : i32 to index
      %33 = memref.load %arg1[%32] : memref<16xi32, #tpu.memory_space<smem>>
      %c0_i32_18 = arith.constant 0 : i32
      %34 = tpu.memref_slice %arg2[%33, %c0_i32_18] : memref<64x128xf32, #tpu.memory_space<any>> -> memref<1x128xf32, #tpu.memory_space<any>>
      %c0_i32_19 = arith.constant 0 : i32
      %35 = tpu.memref_slice %arg3[%30, %c0_i32_19] : memref<16x128xf32, #tpu.memory_space<vmem>> -> memref<1x128xf32, #tpu.memory_space<vmem>>
      tpu.enqueue_dma source(%34 : memref<1x128xf32, #tpu.memory_space<any>>) target(%35 : memref<1x128xf32, #tpu.memory_space<vmem>>) target_semaphore(%arg4 : memref<!tpu.dma_semaphore, #tpu.memory_space<semaphore_mem>>)
      %c8_i32_20 = arith.constant 8 : i32
      %36 = arith.muli %7, %c8_i32_20 : i32
      %c4_i32 = arith.constant 4 : i32
      %37 = arith.addi %36, %c4_i32 : i32
      %38 = arith.addi %0, %37 : i32
      %39 = arith.index_cast %38 : i32 to index
      %40 = memref.load %arg1[%39] : memref<16xi32, #tpu.memory_space<smem>>
      %c0_i32_21 = arith.constant 0 : i32
      %41 = tpu.memref_slice %arg2[%40, %c0_i32_21] : memref<64x128xf32, #tpu.memory_space<any>> -> memref<1x128xf32, #tpu.memory_space<any>>
      %c0_i32_22 = arith.constant 0 : i32
      %42 = tpu.memref_slice %arg3[%37, %c0_i32_22] : memref<16x128xf32, #tpu.memory_space<vmem>> -> memref<1x128xf32, #tpu.memory_space<vmem>>
      tpu.enqueue_dma source(%41 : memref<1x128xf32, #tpu.memory_space<any>>) target(%42 : memref<1x128xf32, #tpu.memory_space<vmem>>) target_semaphore(%arg4 : memref<!tpu.dma_semaphore, #tpu.memory_space<semaphore_mem>>)
      %c8_i32_23 = arith.constant 8 : i32
      %43 = arith.muli %7, %c8_i32_23 : i32
      %c5_i32 = arith.constant 5 : i32
      %44 = arith.addi %43, %c5_i32 : i32
      %45 = arith.addi %0, %44 : i32
      %46 = arith.index_cast %45 : i32 to index
      %47 = memref.load %arg1[%46] : memref<16xi32, #tpu.memory_space<smem>>
      %c0_i32_24 = arith.constant 0 : i32
      %48 = tpu.memref_slice %arg2[%47, %c0_i32_24] : memref<64x128xf32, #tpu.memory_space<any>> -> memref<1x128xf32, #tpu.memory_space<any>>
      %c0_i32_25 = arith.constant 0 : i32
      %49 = tpu.memref_slice %arg3[%44, %c0_i32_25] : memref<16x128xf32, #tpu.memory_space<vmem>> -> memref<1x128xf32, #tpu.memory_space<vmem>>
      tpu.enqueue_dma source(%48 : memref<1x128xf32, #tpu.memory_space<any>>) target(%49 : memref<1x128xf32, #tpu.memory_space<vmem>>) target_semaphore(%arg4 : memref<!tpu.dma_semaphore, #tpu.memory_space<semaphore_mem>>)
      %c8_i32_26 = arith.constant 8 : i32
      %50 = arith.muli %7, %c8_i32_26 : i32
      %c6_i32 = arith.constant 6 : i32
      %51 = arith.addi %50, %c6_i32 : i32
      %52 = arith.addi %0, %51 : i32
      %53 = arith.index_cast %52 : i32 to index
      %54 = memref.load %arg1[%53] : memref<16xi32, #tpu.memory_space<smem>>
      %c0_i32_27 = arith.constant 0 : i32
      %55 = tpu.memref_slice %arg2[%54, %c0_i32_27] : memref<64x128xf32, #tpu.memory_space<any>> -> memref<1x128xf32, #tpu.memory_space<any>>
      %c0_i32_28 = arith.constant 0 : i32
      %56 = tpu.memref_slice %arg3[%51, %c0_i32_28] : memref<16x128xf32, #tpu.memory_space<vmem>> -> memref<1x128xf32, #tpu.memory_space<vmem>>
      tpu.enqueue_dma source(%55 : memref<1x128xf32, #tpu.memory_space<any>>) target(%56 : memref<1x128xf32, #tpu.memory_space<vmem>>) target_semaphore(%arg4 : memref<!tpu.dma_semaphore, #tpu.memory_space<semaphore_mem>>)
      %c8_i32_29 = arith.constant 8 : i32
      %57 = arith.muli %7, %c8_i32_29 : i32
      %c7_i32 = arith.constant 7 : i32
      %58 = arith.addi %57, %c7_i32 : i32
      %59 = arith.addi %0, %58 : i32
      %60 = arith.index_cast %59 : i32 to index
      %61 = memref.load %arg1[%60] : memref<16xi32, #tpu.memory_space<smem>>
      %c0_i32_30 = arith.constant 0 : i32
      %62 = tpu.memref_slice %arg2[%61, %c0_i32_30] : memref<64x128xf32, #tpu.memory_space<any>> -> memref<1x128xf32, #tpu.memory_space<any>>
      %c0_i32_31 = arith.constant 0 : i32
      %63 = tpu.memref_slice %arg3[%58, %c0_i32_31] : memref<16x128xf32, #tpu.memory_space<vmem>> -> memref<1x128xf32, #tpu.memory_space<vmem>>
      tpu.enqueue_dma source(%62 : memref<1x128xf32, #tpu.memory_space<any>>) target(%63 : memref<1x128xf32, #tpu.memory_space<vmem>>) target_semaphore(%arg4 : memref<!tpu.dma_semaphore, #tpu.memory_space<semaphore_mem>>)
    }
    %c2_i32_0 = arith.constant 2 : i32
    tpu.wait_dma2 semaphore(%arg4 : memref<!tpu.dma_semaphore, #tpu.memory_space<semaphore_mem>>) src(%arg3 : memref<16x128xf32, #tpu.memory_space<vmem>>) dst(%arg3 : memref<16x128xf32, #tpu.memory_space<vmem>>)
    %c0 = arith.constant 0 : index
    %c0_1 = arith.constant 0 : index
    %2 = vector.load %arg3[%c0, %c0_1] : memref<16x128xf32, #tpu.memory_space<vmem>>, vector<16x128xf32>
    %cst = arith.constant 5.65685415 : f32
    %3 = vector.broadcast %cst : f32 to vector<16x128xf32>
    %4 = arith.mulf %2, %3 : vector<16x128xf32>
    %c0_2 = arith.constant 0 : index
    %c0_3 = arith.constant 0 : index
    %5 = vector.load %arg3[%c0_2, %c0_3] : memref<16x128xf32, #tpu.memory_space<vmem>>, vector<16x128xf32>
    tpu.vector_store %arg3[%c0_2, %c0_3], %4 {strides = array<i32>} : memref<16x128xf32, #tpu.memory_space<vmem>>, vector<16x128xf32>,
    return
  }
  func.func @transform_1(%arg0: i32, %arg1: memref<16xi32, #tpu.memory_space<smem>>) -> (i32, i32) {
    %c0_i32 = arith.constant 0 : i32
    %c0_i32_0 = arith.constant 0 : i32
    return %arg0, %c0_i32 : i32, i32
  }
}

</mosaic_0001>

<llo_original>
// kernel: tpu_custom_call.1
$region0: #{tpu_custom_call.1}
  #allocation0 [shape = 'u32[]', space=smem, size = 0x4, offset = 0x4, fixed_abs, tag = 'smem constant byte address 0x4 - core index']
  #allocation1 [shape = 'u32[144,128]{1,0:T(1,128)}', space=vmem, size = 0x12000, scoped, tag = 'internal scratch']
  #allocation2 [shape = 's32[1]{0}', space=sflag, size = 0x4, scoped, tag = 'scratch operand']
  #allocation3 [shape = 's32[1]{0}', space=sflag, size = 0x4, scoped, tag = 'scoped memory for tpu_custom_call.1']
  #allocation4 [shape = 'u8[512]{0}', space=smem, size = 0x200, scoped, tag = 'prefetched SMEM operand 0']
  #allocation7 [shape = 's32[]', space=sflag, size = 0x4, offset = 0, fixed_abs, tag = 'sflag constant byte address 0x0 - dummy sync flag']
  #allocation8 [shape = 's32[]', space=sflag, size = 0x4, offset = 0, fixed_abs, tag = 'sflag constant byte address 0x0 - dummy sync flag']
  #allocation9 [shape = 'u32[]', space=smem, size = 0x4, offset = 0x44, fixed_abs, tag = 'smem constant byte address 0x44 - assertion arg 0']
  #allocation10 [shape = 'u32[]', space=smem, size = 0x4, offset = 0x48, fixed_abs, tag = 'smem constant byte address 0x48 - assertion arg 1']
  #allocation11 [shape = 's32[]', space=sflag, size = 0x4, offset = 0, fixed_abs, tag = 'sflag constant byte address 0x0 - dummy sync flag']
  #allocation12 [shape = 's32[]', space=sflag, size = 0x4, offset = 0, fixed_abs, tag = 'sflag constant byte address 0x0 - dummy sync flag']
  #allocation13 [shape = 's32[]', space=sflag, size = 0x4, offset = 0, fixed_abs, tag = 'sflag constant byte address 0x0 - dummy sync flag']
  #allocation14 [shape = 's32[]', space=sflag, size = 0x4, offset = 0, fixed_abs, tag = 'sflag constant byte address 0x0 - dummy sync flag']
  #allocation15 [shape = 's32[]', space=sflag, size = 0x4, offset = 0, fixed_abs, tag = 'sflag constant byte address 0x0 - dummy sync flag']
  #allocation16 [shape = 's32[]', space=sflag, size = 0x4, offset = 0, fixed_abs, tag = 'sflag constant byte address 0x0 - dummy sync flag']
  #allocation17 [shape = 's32[]', space=sflag, size = 0x4, offset = 0, fixed_abs, tag = 'sflag constant byte address 0x0 - dummy sync flag']
  #allocation18 [shape = 's32[]', space=sflag, size = 0x4, offset = 0, fixed_abs, tag = 'sflag constant byte address 0x0 - dummy sync flag']
  #allocation19 [shape = 's32[]', space=sflag, size = 0x4, offset = 0, fixed_abs, tag = 'sflag constant byte address 0x0 - dummy sync flag']
  #allocation20 [shape = 's32[]', space=sflag, size = 0x4, offset = 0, fixed_abs, tag = 'sflag constant byte address 0x0 - dummy sync flag']
  #allocation21 [shape = 's32[]', space=sflag, size = 0x4, offset = 0, fixed_abs, tag = 'sflag constant byte address 0x0 - dummy sync flag']
  #allocation22 [shape = 's32[]', space=sflag, size = 0x4, offset = 0, fixed_abs, tag = 'sflag constant byte address 0x0 - dummy sync flag']
  #allocation23 [shape = 's32[]', space=sflag, size = 0x4, offset = 0, fixed_abs, tag = 'sflag constant byte address 0x0 - dummy sync flag']
  #allocation24 [shape = 's32[]', space=sflag, size = 0x4, offset = 0, fixed_abs, tag = 'sflag constant byte address 0x0 - dummy sync flag']
  %s0 = inlined_call_operand.hbm [shape: s32[16], index: 0, kind: input, shape index: {}]
  %s1 = inlined_call_operand.hbm [shape: f32[64,128], index: 1, kind: input, shape index: {}]
  %s2 = inlined_call_operand.hbm [shape: f32[16,128], index: 2, kind: output, shape index: {}]
  %s3 = sld [smem:[#allocation0]]
  $region49: #{tpu_custom_call.1} parent=0
    _
  %s5 = ssub.s32 1, %s3
  %s6 = scalar_select 0, %s5, %s3
  %8 = dma.hbm_to_smem %s0, 16, [#allocation4], [#allocation3]
  %9 = dma.done [#allocation3], 16
  %10 = sfence
  $region1: #{tpu_custom_call.1} parent=0
    #allocation5 [shape = 'u8[8192]{0}', space=vmem, size = 0x2000, scoped, tag = 'output window, operand 0, single buffered']
    #allocation6 [shape = 's32[1]{0}', space=sflag, size = 0x4, scoped, tag = 'scoped memory for tpu_custom_call.1']
    %11 = vsyncpa [#allocation6], 0
    %s12 = smul.u32 0, 16
    loop: start=0, step=1, limit=2
    $region2: #{tpu_custom_call.1} parent=1 // loop_pre_header
      _
    $region3: #{tpu_custom_call.1} parent=1 // loop_header
      %s14 = sphi 0, %s18
      %p15 = scmp.ge.s32.totalorder %s14, 2
    $region4: #{tpu_custom_call.1} parent=1 // loop_header_branch
      %17 = sbr.rel (%p15) target = $region8
    $region5: #{tpu_custom_call.1} parent=1 // loop_body
      %s19 = smul.u32 %s14, 8
      %s20 = sadd.s32 %s12, %s19
      %s21 = sld [smem:[#allocation4 + %s20]]
      %s22 = smul.addr %s21, 16
      %s23 = scalar_lea.hbm %s1, %s22
      %s24 = scalar_lea.vmem [#allocation5], %s19
      // Predicated region
      $region9: #{tpu_custom_call.1} parent=5 // pred_check
        _
      $region10: #{tpu_custom_call.1} parent=5 // pred_check_branch
        %26 = sbr.rel target = $region12
      $region11: #{tpu_custom_call.1} parent=5 // pred_region
        %27 = sst [smem:[#allocation9]] [#allocation8]
        %28 = sst [smem:[#allocation10]] [#allocation7]
      $region12: #{tpu_custom_call.1} parent=5 // pred_fallthru
        _
      %30 = shalt.err (0)
      %s32 = sshll.u32 %s24, 4
      %s33 = int_to_ptr.vmem [resolvable:$true] %s32
      %35 = dma.hbm_to_vmem [thread:$0]  %s23, 16, %s33, [#allocation2]
      %s36 = sadd.s32 %s19, 1
      %s37 = sadd.s32 %s12, %s36
      %s38 = sld [smem:[#allocation4 + %s37]]
      %s39 = smul.addr %s38, 16
      %s40 = scalar_lea.hbm %s1, %s39
      %s41 = scalar_lea.vmem [#allocation5], %s36
      // Predicated region
      $region13: #{tpu_custom_call.1} parent=5 // pred_check
        _
      $region14: #{tpu_custom_call.1} parent=5 // pred_check_branch
        %43 = sbr.rel target = $region16
      $region15: #{tpu_custom_call.1} parent=5 // pred_region
        %44 = sst [smem:[#allocation9]] [#allocation12]
        %45 = sst [smem:[#allocation10]] [#allocation11]
      $region16: #{tpu_custom_call.1} parent=5 // pred_fallthru
        _
      %47 = shalt.err (0)
      %s49 = sshll.u32 %s41, 4
      %s50 = int_to_ptr.vmem [resolvable:$true] %s49
      %52 = dma.hbm_to_vmem [thread:$0]  %s40, 16, %s50, [#allocation2]
      %s53 = sadd.s32 %s19, 2
      %s54 = sadd.s32 %s12, %s53
      %s55 = sld [smem:[#allocation4 + %s54]]
      %s56 = smul.addr %s55, 16
      %s57 = scalar_lea.hbm %s1, %s56
      %s58 = scalar_lea.vmem [#allocation5], %s53
      // Predicated region
      $region17: #{tpu_custom_call.1} parent=5 // pred_check
        _
      $region18: #{tpu_custom_call.1} parent=5 // pred_check_branch
        %60 = sbr.rel target = $region20
      $region19: #{tpu_custom_call.1} parent=5 // pred_region
        %61 = sst [smem:[#allocation9]] [#allocation14]
        %62 = sst [smem:[#allocation10]] [#allocation13]
      $region20: #{tpu_custom_call.1} parent=5 // pred_fallthru
        _
      %64 = shalt.err (0)
      %s66 = sshll.u32 %s58, 4
      %s67 = int_to_ptr.vmem [resolvable:$true] %s66
      %69 = dma.hbm_to_vmem [thread:$0]  %s57, 16, %s67, [#allocation2]
      %s70 = sadd.s32 %s19, 3
      %s71 = sadd.s32 %s12, %s70
      %s72 = sld [smem:[#allocation4 + %s71]]
      %s73 = smul.addr %s72, 16
      %s74 = scalar_lea.hbm %s1, %s73
      %s75 = scalar_lea.vmem [#allocation5], %s70
      // Predicated region
      $region21: #{tpu_custom_call.1} parent=5 // pred_check
        _
      $region22: #{tpu_custom_call.1} parent=5 // pred_check_branch
        %77 = sbr.rel target = $region24
      $region23: #{tpu_custom_call.1} parent=5 // pred_region
        %78 = sst [smem:[#allocation9]] [#allocation16]
        %79 = sst [smem:[#allocation10]] [#allocation15]
      $region24: #{tpu_custom_call.1} parent=5 // pred_fallthru
        _
      %81 = shalt.err (0)
      %s83 = sshll.u32 %s75, 4
      %s84 = int_to_ptr.vmem [resolvable:$true] %s83
      %86 = dma.hbm_to_vmem [thread:$0]  %s74, 16, %s84, [#allocation2]
      %s87 = sadd.s32 %s19, 4
      %s88 = sadd.s32 %s12, %s87
      %s89 = sld [smem:[#allocation4 + %s88]]
      %s90 = smul.addr %s89, 16
      %s91 = scalar_lea.hbm %s1, %s90
      %s92 = scalar_lea.vmem [#allocation5], %s87
      // Predicated region
      $region25: #{tpu_custom_call.1} parent=5 // pred_check
        _
      $region26: #{tpu_custom_call.1} parent=5 // pred_check_branch
        %94 = sbr.rel target = $region28
      $region27: #{tpu_custom_call.1} parent=5 // pred_region
        %95 = sst [smem:[#allocation9]] [#allocation18]
        %96 = sst [smem:[#allocation10]] [#allocation17]
      $region28: #{tpu_custom_call.1} parent=5 // pred_fallthru
        _
      %98 = shalt.err (0)
      %s100 = sshll.u32 %s92, 4
      %s101 = int_to_ptr.vmem [resolvable:$true] %s100
      %103 = dma.hbm_to_vmem [thread:$0]  %s91, 16, %s101, [#allocation2]
      %s104 = sadd.s32 %s19, 5
      %s105 = sadd.s32 %s12, %s104
      %s106 = sld [smem:[#allocation4 + %s105]]
      %s107 = smul.addr %s106, 16
      %s108 = scalar_lea.hbm %s1, %s107
      %s109 = scalar_lea.vmem [#allocation5], %s104
      // Predicated region
      $region29: #{tpu_custom_call.1} parent=5 // pred_check
        _
      $region30: #{tpu_custom_call.1} parent=5 // pred_check_branch
        %111 = sbr.rel target = $region32
      $region31: #{tpu_custom_call.1} parent=5 // pred_region
        %112 = sst [smem:[#allocation9]] [#allocation20]
        %113 = sst [smem:[#allocation10]] [#allocation19]
      $region32: #{tpu_custom_call.1} parent=5 // pred_fallthru
        _
      %115 = shalt.err (0)
      %s117 = sshll.u32 %s109, 4
      %s118 = int_to_ptr.vmem [resolvable:$true] %s117
      %120 = dma.hbm_to_vmem [thread:$0]  %s108, 16, %s118, [#allocation2]
      %s121 = sadd.s32 %s19, 6
      %s122 = sadd.s32 %s12, %s121
      %s123 = sld [smem:[#allocation4 + %s122]]
      %s124 = smul.addr %s123, 16
      %s125 = scalar_lea.hbm %s1, %s124
      %s126 = scalar_lea.vmem [#allocation5], %s121
      // Predicated region
      $region33: #{tpu_custom_call.1} parent=5 // pred_check
        _
      $region34: #{tpu_custom_call.1} parent=5 // pred_check_branch
        %128 = sbr.rel target = $region36
      $region35: #{tpu_custom_call.1} parent=5 // pred_region
        %129 = sst [smem:[#allocation9]] [#allocation22]
        %130 = sst [smem:[#allocation10]] [#allocation21]
      $region36: #{tpu_custom_call.1} parent=5 // pred_fallthru
        _
      %132 = shalt.err (0)
      %s134 = sshll.u32 %s126, 4
      %s135 = int_to_ptr.vmem [resolvable:$true] %s134
      %137 = dma.hbm_to_vmem [thread:$0]  %s125, 16, %s135, [#allocation2]
      %s138 = sadd.s32 %s19, 7
      %s139 = sadd.s32 %s12, %s138
      %s140 = sld [smem:[#allocation4 + %s139]]
      %s141 = smul.addr %s140, 16
      %s142 = scalar_lea.hbm %s1, %s141
      %s143 = scalar_lea.vmem [#allocation5], %s138
      // Predicated region
      $region37: #{tpu_custom_call.1} parent=5 // pred_check
        _
      $region38: #{tpu_custom_call.1} parent=5 // pred_check_branch
        %145 = sbr.rel target = $region40
      $region39: #{tpu_custom_call.1} parent=5 // pred_region
        %146 = sst [smem:[#allocation9]] [#allocation24]
        %147 = sst [smem:[#allocation10]] [#allocation23]
      $region40: #{tpu_custom_call.1} parent=5 // pred_fallthru
        _
      %149 = shalt.err (0)
      %s151 = sshll.u32 %s143, 4
      %s152 = int_to_ptr.vmem [resolvable:$true] %s151
      %154 = dma.hbm_to_vmem [thread:$0]  %s142, 16, %s152, [#allocation2]
    $region6: #{tpu_custom_call.1} parent=1 // loop_footer
      %s18 = sadd.s32 1, %s14
    $region7: #{tpu_custom_call.1} parent=1 // loop_footer_branch
      %13 = sbr.rel target = $region3
    $region8: #{tpu_custom_call.1} parent=1 // loop_exit
      _
    %s155 = smul.u32 16, 1
    %s156 = sshll.u32 %s155, 4
    %157 = dma.done [#allocation2], %s156
    %v158 = vld [vmem:[#allocation5] sm:$0xff]
    %v159 = vld [vmem:[#allocation5 + $0x8] sm:$0xff]
    %v160 = vmul.f32 %v158, 5.656854
    %v161 = vmul.f32 %v159, 5.656854
    %162 = vst [vmem:[#allocation5] sm:$0xff] %v160
    %163 = vst [vmem:[#allocation5 + $0x8] sm:$0xff] %v161
    // Predicated region
    $region41: #{tpu_custom_call.1} parent=1 // pred_check
      _
    $region42: #{tpu_custom_call.1} parent=1 // pred_check_branch
      %165 = sbr.rel (0) target = $region44
    $region43: #{tpu_custom_call.1} parent=1 // pred_region
      %s167 = ssub.s32 256, 256
      %168 = vsyncadd [#allocation6], %s167
      %s169 = sshll.u32 [#allocation5], 4
      %s170 = int_to_ptr.vmem [resolvable:$true] %s169
      %175 = dma.vmem_to_hbm [thread:$0]  %s170, 256, %s2, [#allocation6], 128, 128, 8
    $region44: #{tpu_custom_call.1} parent=1 // pred_fallthru
      _
    // Predicated region
    $region45: #{tpu_custom_call.1} parent=1 // pred_check
      _
    $region46: #{tpu_custom_call.1} parent=1 // pred_check_branch
      %177 = sbr.rel (0) target = $region48
    $region47: #{tpu_custom_call.1} parent=1 // pred_region
      %178 = dma.done [#allocation6], 256
    $region48: #{tpu_custom_call.1} parent=1 // pred_fallthru
      _
    %179 = vsyncpa [#allocation6], 1
  %180 = vsyncmov [#allocation2]
  %s181 = vpop.sfrf %180
  %p182 = scmp.eq.s32.totalorder %s181, 0
  %p183 = pneg %p182
  %185 = shalt.err (%p183)

</llo_original>
